<compile_context>
chip_gen: v6e
topology: v6e:2x2x1
jax: 0.10.0
libtpu: 0.0.40
codegen_flags: <defaults>
</compile_context>

<pallas_src>
import functools

import jax
import jax.numpy as jnp
from jax.experimental import pallas as pl
from jax.experimental.pallas import tpu as pltpu

SMOOTH = 1e-4
ALPHA = 0.0          # default; (1 - x)**0 * x == x
_NEG_BIG = -1e30     # finite "minus infinity" for padded logits (avoids inf - inf = NaN)


def _round_up(x: int, m: int) -> int:
    return ((x + m - 1) // m) * m


def _cdiv(a: int, b: int) -> int:
    return (a + b - 1) // b


def _default_num_splits() -> int:
    """2 on dual-TensorCore v7x (megacore split of N), 1 on single-core v5e/v6e."""
    try:
        kind = jax.devices()[0].device_kind.lower()
    except Exception:
        return 1
    return 2 if ("v7" in kind or "7x" in kind) else 1


def _dice_stats_kernel(x_ref, t_ref, out_ref, psum_ref, cnt_ref, intr_ref, *, approx):
    """Accumulate per-class (sum_i p_ic, sum_i t_ic, sum_i p_ic*t_ic) for one N-split."""
    i = pl.program_id(1)            # streaming tile along the sample axis (reduction)
    n_tiles = pl.num_programs(1)

    @pl.when(i == 0)
    def _init():
        psum_ref[...] = jnp.zeros_like(psum_ref)
        cnt_ref[...] = jnp.zeros_like(cnt_ref)
        intr_ref[...] = jnp.zeros_like(intr_ref)

    x = x_ref[...].astype(jnp.float32)   # (C_sub, TILE): classes on sublanes, samples on lanes
    t = t_ref[...]                       # (1, TILE) int32 labels; -1 marks padded samples
    c_sub, tile = x.shape

    # Softmax over the class (sublane) axis; padded class rows hold -1e30 -> exp == 0.
    m = jnp.max(x, axis=0, keepdims=True)                       # (1, TILE)
    e = jnp.exp(x - m)
    inv = pl.reciprocal(jnp.sum(e, axis=0, keepdims=True), approx=approx)
    p = e * inv                                                 # (C_sub, TILE)

    if ALPHA != 0.0:  # trace-time guard: default ALPHA == 0.0 emits no pow at all
        p = ((1.0 - p) ** ALPHA) * p

    # Validity of a sample column comes straight from the padded target (== -1 when padded).
    valid = (t >= 0).astype(jnp.float32)                        # (1, TILE)

    # One-hot target (class index along sublanes).  Identically zero on padded columns,
    # so cnt and intr need no extra masking; only psum does.
    cls = jax.lax.broadcasted_iota(jnp.int32, (c_sub, tile), 0)
    oh = (cls == t).astype(jnp.float32)                         # (C_sub, TILE)

    # Per-class reductions only -- no (N, C) loss tensor, divide or subtract here.
    psum_ref[...] += jnp.sum(p * valid, axis=1, keepdims=True)  # (C_sub, 1) sum_i p_ic
    cnt_ref[...] += jnp.sum(oh, axis=1, keepdims=True)          # (C_sub, 1) sum_i t_ic
    intr_ref[...] += jnp.sum(p * oh, axis=1, keepdims=True)     # (C_sub, 1) sum_i p_ic*t_ic

    @pl.when(i == n_tiles - 1)
    def _finalize():
        lane = jax.lax.broadcasted_iota(jnp.int32, out_ref.shape, 1)
        res = (jnp.where(lane == 0, psum_ref[...], 0.0)
               + jnp.where(lane == 1, cnt_ref[...], 0.0)
               + jnp.where(lane == 2, intr_ref[...], 0.0))
        out_ref[...] = res                                      # (C_sub, 128) partial stats


def dice_loss(logits: jax.Array, target: jax.Array, *,
              block_bytes: int = 2 * 1024 * 1024,
              num_splits: int | None = None,
              approx_reciprocal: bool = False) -> jax.Array:
    """logits: (N, C) float, target: (N,) int -> scalar float32 DiceLoss (reduction='mean')."""
    n, c = logits.shape
    if c == 1:
        # TODO(synk): binary (sigmoid) path of the module is not implemented.
        raise NotImplementedError("binary-class path (logits_size == 1) not implemented")

    if num_splits is None:
        num_splits = _default_num_splits()

    c_sub = _round_up(c, 8)                                     # class axis -> sublanes

    # Stream bf16 as bf16 (half the HBM bytes); anything else streams as f32.
    stream_dtype = jnp.bfloat16 if logits.dtype == jnp.bfloat16 else jnp.float32
    itemsize = jnp.dtype(stream_dtype).itemsize

    # Lane tile from a ~block_bytes budget per logits block (multiple of 128), clamped so we
    # never pad (much) past the real per-split work.  Big blocks amortize the ~0.35us/step
    # pipeline overhead; double-buffered they stay well under every generation's VMEM limit.
    cols_needed = _round_up(max(1, _cdiv(n, num_splits)), 128)
    cols_budget = max(128, (block_bytes // (c_sub * itemsize)) // 128 * 128)
    tile_cols = max(128, min(cols_budget, cols_needed))

    n_pad = _round_up(n, tile_cols * num_splits)
    tiles_per_split = n_pad // (tile_cols * num_splits)

    # Transposed, lane-dense layout: samples on lanes, classes on sublanes.
    xt = jnp.transpose(logits.astype(stream_dtype))             # (C, N)
    xt = jnp.pad(xt, ((0, c_sub - c), (0, n_pad - n)), constant_values=_NEG_BIG)
    t2d = target.astype(jnp.int32).reshape(1, n)
    t2d = jnp.pad(t2d, ((0, 0), (0, n_pad - n)), constant_values=-1)  # -1 => padded sample

    kernel = functools.partial(_dice_stats_kernel, approx=approx_reciprocal)

    partials = pl.pallas_call(
        kernel,
        out_shape=jax.ShapeDtypeStruct((num_splits * c_sub, 128), jnp.float32),
        grid_spec=pltpu.PrefetchScalarGridSpec(
            num_scalar_prefetch=0,
            grid=(num_splits, tiles_per_split),
            in_specs=[
                pl.BlockSpec((c_sub, tile_cols),
                             lambda s, i: (0, s * tiles_per_split + i)),
                pl.BlockSpec((1, tile_cols),
                             lambda s, i: (0, s * tiles_per_split + i)),
            ],
            out_specs=pl.BlockSpec((c_sub, 128), lambda s, i: (s, 0)),
            scratch_shapes=[pltpu.VMEM((c_sub, 1), jnp.float32)] * 3,
        ),
        compiler_params=pltpu.CompilerParams(
            dimension_semantics=("parallel", "arbitrary"),
            vmem_limit_bytes=32 * 1024 * 1024,
        ),
    )(xt, t2d)

    # Tiny O(C) epilogue: combine the per-split partial stats and form the loss.
    parts = partials.reshape(num_splits, c_sub, 128)
    psum = jnp.sum(parts[:, :c, 0], axis=0)                     # (C,)  sum_i p_ic
    cnt = jnp.sum(parts[:, :c, 1], axis=0)                      # (C,)  sum_i t_ic
    intr = jnp.sum(parts[:, :c, 2], axis=0)                     # (C,)  sum_i p_ic * t_ic
    denom = psum + cnt + SMOOTH
    loss = jnp.float32(c) - jnp.sum((2.0 * intr + n * SMOOTH) / denom) / jnp.float32(n)
    return loss


def dice_loss_ref(logits, target):
    """Pure-JAX reference mirroring the PyTorch module (default args)."""
    n, c = logits.shape
    p = jax.nn.softmax(logits.astype(jnp.float32), axis=1)
    if ALPHA != 0.0:
        p = ((1.0 - p) ** ALPHA) * p
    oh = jax.nn.one_hot(target, c, dtype=jnp.float32)
    loss = jnp.zeros((n,), jnp.float32)
    for label_idx in range(c):
        pi = p[:, label_idx]
        ti = oh[:, label_idx]
        inter = pi * ti                                    # per-row "sum" over size-1 last dim
        denom = pi.sum() + ti.sum() + SMOOTH
        loss = loss + (1.0 - (2.0 * inter + SMOOTH) / denom)
    return loss.mean()


if __name__ == "__main__":
    key = jax.random.PRNGKey(0)
    k1, k2, k3, k4 = jax.random.split(key, 4)

    # Small canonical shape: N samples, C classes (logits_size).
    N, C = 16, 8
    logits = jax.random.normal(k1, (N, C), dtype=jnp.float32)
    target = jax.random.randint(k2, (N,), 0, C, dtype=jnp.int32)

    out = jax.block_until_ready(dice_loss(logits, target))
    ref = dice_loss_ref(logits, target)
    assert jnp.allclose(out, ref, atol=1e-5, rtol=1e-5), (out, ref)

    # Non-multiple N and non-multiple-of-8 C: exercises sample-column and class-row padding.
    N2, C2 = 777, 5
    logits2 = jax.random.normal(k3, (N2, C2), dtype=jnp.float32)
    target2 = jax.random.randint(k4, (N2,), 0, C2, dtype=jnp.int32)
    out2 = jax.block_until_ready(dice_loss(logits2, target2))
    ref2 = dice_loss_ref(logits2, target2)
    assert jnp.allclose(out2, ref2, atol=1e-4, rtol=1e-4), (out2, ref2)

    # bf16 streaming path (upcast to f32 inside the kernel); reference on the rounded values.
    logits_bf16 = logits2.astype(jnp.bfloat16)
    out3 = jax.block_until_ready(dice_loss(logits_bf16, target2))
    ref3 = dice_loss_ref(logits_bf16.astype(jnp.float32), target2)
    assert jnp.allclose(out3, ref3, atol=1e-4, rtol=1e-4), (out3, ref3)

    print("KERNEL_OK")
</pallas_src>

<mosaic_0001>
module attributes {stable_mosaic.version = 11 : i64} {
  func.func @_dice_stats_kernel(%arg0: i32, %arg1: i32, %arg2: memref<8x128xf32, #tpu.memory_space<vmem>>, %arg3: memref<1x128xi32, #tpu.memory_space<vmem>>, %arg4: memref<8x128xf32, #tpu.memory_space<vmem>>, %arg5: memref<8x1xf32, #tpu.memory_space<vmem>>, %arg6: memref<8x1xf32, #tpu.memory_space<vmem>>, %arg7: memref<8x1xf32, #tpu.memory_space<vmem>>) attributes {dimension_semantics = [#tpu.dimension_semantics<parallel>, #tpu.dimension_semantics<arbitrary>], iteration_bounds = array<i64: 1, 1>, scalar_prefetch = 0 : i64, scratch_operands = 3 : i64, tpu.core_type = #tpu.core_type<tc>, window_params = [{transform_indices = @transform_0, window_bounds = array<i64: 8, 128>}, {transform_indices = @transform_1, window_bounds = array<i64: 1, 128>}, {transform_indices = @transform_2, window_bounds = array<i64: 8, 128>}]} {
    %c0_i32 = arith.constant 0 : i32
    %0 = arith.cmpi eq, %arg1, %c0_i32 : i32
    %1 = arith.extui %0 : i1 to i32
    %c0_i32_0 = arith.constant 0 : i32
    %2 = arith.cmpi ne, %1, %c0_i32_0 : i32
    scf.if %2 {
      %cst_23 = arith.constant 0.000000e+00 : f32
      %45 = vector.broadcast %cst_23 : f32 to vector<8x1xf32>
      %c0_24 = arith.constant 0 : index
      %c0_25 = arith.constant 0 : index
      %46 = vector.load %arg5[%c0_24, %c0_25] : memref<8x1xf32, #tpu.memory_space<vmem>>, vector<8x1xf32>
      tpu.vector_store %arg5[%c0_24, %c0_25], %45 {strides = array<i32>} : memref<8x1xf32, #tpu.memory_space<vmem>>, vector<8x1xf32>,
      %cst_26 = arith.constant 0.000000e+00 : f32
      %47 = vector.broadcast %cst_26 : f32 to vector<8x1xf32>
      %c0_27 = arith.constant 0 : index
      %c0_28 = arith.constant 0 : index
      %48 = vector.load %arg6[%c0_27, %c0_28] : memref<8x1xf32, #tpu.memory_space<vmem>>, vector<8x1xf32>
      tpu.vector_store %arg6[%c0_27, %c0_28], %47 {strides = array<i32>} : memref<8x1xf32, #tpu.memory_space<vmem>>, vector<8x1xf32>,
      %cst_29 = arith.constant 0.000000e+00 : f32
      %49 = vector.broadcast %cst_29 : f32 to vector<8x1xf32>
      %c0_30 = arith.constant 0 : index
      %c0_31 = arith.constant 0 : index
      %50 = vector.load %arg7[%c0_30, %c0_31] : memref<8x1xf32, #tpu.memory_space<vmem>>, vector<8x1xf32>
      tpu.vector_store %arg7[%c0_30, %c0_31], %49 {strides = array<i32>} : memref<8x1xf32, #tpu.memory_space<vmem>>, vector<8x1xf32>,
    } else {
    }
    %c0 = arith.constant 0 : index
    %c0_1 = arith.constant 0 : index
    %3 = vector.load %arg2[%c0, %c0_1] : memref<8x128xf32, #tpu.memory_space<vmem>>, vector<8x128xf32>
    %c0_2 = arith.constant 0 : index
    %c0_3 = arith.constant 0 : index
    %4 = vector.load %arg3[%c0_2, %c0_3] : memref<1x128xi32, #tpu.memory_space<vmem>>, vector<1x128xi32>
    %cst = arith.constant dense<0xFF800000> : vector<128xf32>
    %5 = vector.multi_reduction <maximumf>, %3, %cst [0] : vector<8x128xf32> to vector<128xf32>
    %6 = vector.shape_cast %5 : vector<128xf32> to vector<1x128xf32>
    %7 = vector.broadcast %6 : vector<1x128xf32> to vector<8x128xf32>
    %8 = arith.subf %3, %7 : vector<8x128xf32>
    %9 = math.exp %8 : vector<8x128xf32>
    %cst_4 = arith.constant dense<0.000000e+00> : vector<128xf32>
    %10 = vector.multi_reduction <add>, %9, %cst_4 [0] : vector<8x128xf32> to vector<128xf32>
    %11 = vector.shape_cast %10 : vector<128xf32> to vector<1x128xf32>
    %12 = tpu.reciprocal %11 : vector<1x128xf32> -> vector<1x128xf32>
    %13 = vector.broadcast %12 : vector<1x128xf32> to vector<8x128xf32>
    %14 = arith.mulf %9, %13 : vector<8x128xf32>
    %c0_i32_5 = arith.constant 0 : i32
    %15 = vector.broadcast %c0_i32_5 : i32 to vector<1x128xi32>
    %16 = arith.cmpi sge, %4, %15 : vector<1x128xi32>
    %17 = arith.extui %16 : vector<1x128xi1> to vector<1x128xi32>
    %18 = arith.sitofp %17 : vector<1x128xi32> to vector<1x128xf32>
    %19 = tpu.iota {dimensions = array<i32: 0>} : vector<8x128xi32>
    %20 = vector.broadcast %4 : vector<1x128xi32> to vector<8x128xi32>
    %21 = arith.cmpi eq, %19, %20 : vector<8x128xi32>
    %22 = arith.extui %21 : vector<8x128xi1> to vector<8x128xi32>
    %23 = arith.sitofp %22 : vector<8x128xi32> to vector<8x128xf32>
    %c0_6 = arith.constant 0 : index
    %c0_7 = arith.constant 0 : index
    %24 = vector.load %arg5[%c0_6, %c0_7] : memref<8x1xf32, #tpu.memory_space<vmem>>, vector<8x1xf32>
    %25 = vector.broadcast %18 : vector<1x128xf32> to vector<8x128xf32>
    %26 = arith.mulf %14, %25 : vector<8x128xf32>
    %cst_8 = arith.constant dense<0.000000e+00> : vector<8xf32>
    %27 = vector.multi_reduction <add>, %26, %cst_8 [1] : vector<8x128xf32> to vector<8xf32>
    %28 = vector.shape_cast %27 : vector<8xf32> to vector<8x1xf32>
    %29 = arith.addf %24, %28 : vector<8x1xf32>
    %c0_9 = arith.constant 0 : index
    %c0_10 = arith.constant 0 : index
    %30 = vector.load %arg5[%c0_9, %c0_10] : memref<8x1xf32, #tpu.memory_space<vmem>>, vector<8x1xf32>
    tpu.vector_store %arg5[%c0_9, %c0_10], %29 {strides = array<i32>} : memref<8x1xf32, #tpu.memory_space<vmem>>, vector<8x1xf32>,
    %c0_11 = arith.constant 0 : index
    %c0_12 = arith.constant 0 : index
    %31 = vector.load %arg6[%c0_11, %c0_12] : memref<8x1xf32, #tpu.memory_space<vmem>>, vector<8x1xf32>
    %cst_13 = arith.constant dense<0.000000e+00> : vector<8xf32>
    %32 = vector.multi_reduction <add>, %23, %cst_13 [1] : vector<8x128xf32> to vector<8xf32>
    %33 = vector.shape_cast %32 : vector<8xf32> to vector<8x1xf32>
    %34 = arith.addf %31, %33 : vector<8x1xf32>
    %c0_14 = arith.constant 0 : index
    %c0_15 = arith.constant 0 : index
    %35 = vector.load %arg6[%c0_14, %c0_15] : memref<8x1xf32, #tpu.memory_space<vmem>>, vector<8x1xf32>
    tpu.vector_store %arg6[%c0_14, %c0_15], %34 {strides = array<i32>} : memref<8x1xf32, #tpu.memory_space<vmem>>, vector<8x1xf32>,
    %c0_16 = arith.constant 0 : index
    %c0_17 = arith.constant 0 : index
    %36 = vector.load %arg7[%c0_16, %c0_17] : memref<8x1xf32, #tpu.memory_space<vmem>>, vector<8x1xf32>
    %37 = arith.mulf %14, %23 : vector<8x128xf32>
    %cst_18 = arith.constant dense<0.000000e+00> : vector<8xf32>
    %38 = vector.multi_reduction <add>, %37, %cst_18 [1] : vector<8x128xf32> to vector<8xf32>
    %39 = vector.shape_cast %38 : vector<8xf32> to vector<8x1xf32>
    %40 = arith.addf %36, %39 : vector<8x1xf32>
    %c0_19 = arith.constant 0 : index
    %c0_20 = arith.constant 0 : index
    %41 = vector.load %arg7[%c0_19, %c0_20] : memref<8x1xf32, #tpu.memory_space<vmem>>, vector<8x1xf32>
    tpu.vector_store %arg7[%c0_19, %c0_20], %40 {strides = array<i32>} : memref<8x1xf32, #tpu.memory_space<vmem>>, vector<8x1xf32>,
    %c0_i32_21 = arith.constant 0 : i32
    %42 = arith.cmpi eq, %arg1, %c0_i32_21 : i32
    %43 = arith.extui %42 : i1 to i32
    %c0_i32_22 = arith.constant 0 : i32
    %44 = arith.cmpi ne, %43, %c0_i32_22 : i32
    scf.if %44 {
      %45 = tpu.iota {dimensions = array<i32: 1>} : vector<8x128xi32>
      %c0_i32_23 = arith.constant 0 : i32
      %46 = vector.broadcast %c0_i32_23 : i32 to vector<8x128xi32>
      %47 = arith.cmpi eq, %45, %46 : vector<8x128xi32>
      %c0_24 = arith.constant 0 : index
      %c0_25 = arith.constant 0 : index
      %48 = vector.load %arg5[%c0_24, %c0_25] : memref<8x1xf32, #tpu.memory_space<vmem>>, vector<8x1xf32>
      %cst_26 = arith.constant 0.000000e+00 : f32
      %49 = vector.shape_cast %48 : vector<8x1xf32> to vector<8x1xf32>
      %50 = vector.broadcast %49 : vector<8x1xf32> to vector<8x128xf32>
      %51 = vector.broadcast %cst_26 : f32 to vector<8x128xf32>
      %52 = arith.select %47, %50, %51 : vector<8x128xi1>, vector<8x128xf32>
      %c1_i32 = arith.constant 1 : i32
      %53 = vector.broadcast %c1_i32 : i32 to vector<8x128xi32>
      %54 = arith.cmpi eq, %45, %53 : vector<8x128xi32>
      %c0_27 = arith.constant 0 : index
      %c0_28 = arith.constant 0 : index
      %55 = vector.load %arg6[%c0_27, %c0_28] : memref<8x1xf32, #tpu.memory_space<vmem>>, vector<8x1xf32>
      %cst_29 = arith.constant 0.000000e+00 : f32
      %56 = vector.shape_cast %55 : vector<8x1xf32> to vector<8x1xf32>
      %57 = vector.broadcast %56 : vector<8x1xf32> to vector<8x128xf32>
      %58 = vector.broadcast %cst_29 : f32 to vector<8x128xf32>
      %59 = arith.select %54, %57, %58 : vector<8x128xi1>, vector<8x128xf32>
      %60 = arith.addf %52, %59 : vector<8x128xf32>
      %c2_i32 = arith.constant 2 : i32
      %61 = vector.broadcast %c2_i32 : i32 to vector<8x128xi32>
      %62 = arith.cmpi eq, %45, %61 : vector<8x128xi32>
      %c0_30 = arith.constant 0 : index
      %c0_31 = arith.constant 0 : index
      %63 = vector.load %arg7[%c0_30, %c0_31] : memref<8x1xf32, #tpu.memory_space<vmem>>, vector<8x1xf32>
      %cst_32 = arith.constant 0.000000e+00 : f32
      %64 = vector.shape_cast %63 : vector<8x1xf32> to vector<8x1xf32>
      %65 = vector.broadcast %64 : vector<8x1xf32> to vector<8x128xf32>
      %66 = vector.broadcast %cst_32 : f32 to vector<8x128xf32>
      %67 = arith.select %62, %65, %66 : vector<8x128xi1>, vector<8x128xf32>
      %68 = arith.addf %60, %67 : vector<8x128xf32>
      %c0_33 = arith.constant 0 : index
      %c0_34 = arith.constant 0 : index
      %69 = vector.load %arg4[%c0_33, %c0_34] : memref<8x128xf32, #tpu.memory_space<vmem>>, vector<8x128xf32>
      tpu.vector_store %arg4[%c0_33, %c0_34], %68 {strides = array<i32>} : memref<8x128xf32, #tpu.memory_space<vmem>>, vector<8x128xf32>,
    } else {
    }
    return
  }
  func.func @transform_0(%arg0: i32, %arg1: i32) -> (i32, i32) {
    %c1_i32 = arith.constant 1 : i32
    %0 = arith.muli %arg0, %c1_i32 : i32
    %1 = arith.addi %0, %arg1 : i32
    %c0_i32 = arith.constant 0 : i32
    %c0_i32_0 = arith.constant 0 : i32
    return %c0_i32, %1 : i32, i32
  }
  func.func @transform_1(%arg0: i32, %arg1: i32) -> (i32, i32) {
    %c1_i32 = arith.constant 1 : i32
    %0 = arith.muli %arg0, %c1_i32 : i32
    %1 = arith.addi %0, %arg1 : i32
    %c0_i32 = arith.constant 0 : i32
    %c0_i32_0 = arith.constant 0 : i32
    return %c0_i32, %1 : i32, i32
  }
  func.func @transform_2(%arg0: i32, %arg1: i32) -> (i32, i32) {
    %c0_i32 = arith.constant 0 : i32
    %c0_i32_0 = arith.constant 0 : i32
    return %arg0, %c0_i32 : i32, i32
  }
}

</mosaic_0001>

<llo_original>
// kernel: tpu_custom_call.1
$region0: #{tpu_custom_call.1}
  #allocation0 [shape = 'u32[]', space=smem, size = 0x4, offset = 0x4, fixed_abs, tag = 'smem constant byte address 0x4 - core index']
  #allocation1 [shape = 'u32[144,128]{1,0:T(1,128)}', space=vmem, size = 0x12000, scoped, tag = 'internal scratch']
  #allocation2 [shape = 'f32[8,1]{1,0:T(8,128)}', space=vmem, size = 0x1000, scoped, tag = 'scratch operand']
  #allocation3 [shape = 'f32[8,1]{1,0:T(8,128)}', space=vmem, size = 0x1000, scoped, tag = 'scratch operand']
  #allocation4 [shape = 'f32[8,1]{1,0:T(8,128)}', space=vmem, size = 0x1000, scoped, tag = 'scratch operand']
  %s0 = inlined_call_operand.hbm [shape: f32[8,128], index: 0, kind: input, shape index: {}]
  %s1 = inlined_call_operand.vmem [shape: s32[1,128], index: 1, kind: input, shape index: {}]
  %s2 = inlined_call_operand.hbm [shape: f32[8,128], index: 2, kind: output, shape index: {}]
  %s3 = sld [smem:[#allocation0]]
  $region30: #{tpu_custom_call.1} parent=0
    _
  %s5 = ssub.s32 1, %s3
  %s6 = scalar_select 0, %s5, %s3
  $region1: #{tpu_custom_call.1} parent=0
    #allocation5 [shape = 'u8[4096]{0}', space=vmem, size = 0x1000, scoped, tag = 'input window, operand 0, single buffered']
    #allocation6 [shape = 's32[1]{0}', space=sflag, size = 0x4, scoped, tag = 'scoped memory for tpu_custom_call.1']
    #allocation7 [shape = 's32[1]{0}', space=sflag, size = 0x4, scoped, tag = 'scoped memory for tpu_custom_call.1']
    #allocation8 [shape = 'u8[4096]{0}', space=vmem, size = 0x1000, scoped, tag = 'output window, operand 0, single buffered']
    %7 = vsyncpa [#allocation6], 0
    %8 = vsyncpa [#allocation7], 0
    // Predicated region
    $region2: #{tpu_custom_call.1} parent=1 // pred_check
      _
    $region3: #{tpu_custom_call.1} parent=1 // pred_check_branch
      %10 = sbr.rel (0) target = $region5
    $region4: #{tpu_custom_call.1} parent=1 // pred_region
      %s11 = sadd.s32 0, 0
      %s13 = ssub.s32 128, 128
      %14 = vsyncadd [#allocation6], %s13
      %s15 = smul.addr %s11, 128
      %s16 = scalar_lea.hbm %s0, %s15
      %s18 = sshll.u32 [#allocation5], 4
      %s19 = int_to_ptr.vmem [resolvable:$true] %s18
      %21 = dma.hbm_to_vmem [thread:$0]  %s16, 128, %s19, [#allocation6]
    $region5: #{tpu_custom_call.1} parent=1 // pred_fallthru
      _
    // Predicated region
    $region6: #{tpu_custom_call.1} parent=1 // pred_check
      _
    $region7: #{tpu_custom_call.1} parent=1 // pred_check_branch
      %23 = sbr.rel (0) target = $region9
    $region8: #{tpu_custom_call.1} parent=1 // pred_region
      %s24 = sadd.s32 0, 0
      %p25 = scmp.lt.s32.totalorder %s24, 0
      %s26 = scalar_select %p25, %s24, 0
      %s27 = scalar_lea.vmem %s1, %s26
      %s28 = sadd.s32 0, 0
    $region9: #{tpu_custom_call.1} parent=1 // pred_fallthru
      _
    // Predicated region
    $region10: #{tpu_custom_call.1} parent=1 // pred_check
      _
    $region11: #{tpu_custom_call.1} parent=1 // pred_check_branch
      %30 = sbr.rel (0) target = $region13
    $region12: #{tpu_custom_call.1} parent=1 // pred_region
      %31 = dma.done [#allocation6], 128
    $region13: #{tpu_custom_call.1} parent=1 // pred_fallthru
      _
    %s32 = sadd.s32 0, 0
    %p33 = scmp.lt.s32.totalorder %s32, 0
    %s34 = scalar_select %p33, %s32, 0
    %s35 = scalar_lea.vmem %s1, %s34
    %s36 = sadd.s32 0, 0
    %s37 = sadd.s32 0, 0
    %p38 = scmp.lt.s32.totalorder %s37, 0
    %s39 = scalar_select %p38, %s37, 0
    %s40 = scalar_lea.vmem %s1, %s39
    %s41 = sadd.s32 0, 0
    %p42 = scmp.eq.s32.totalorder 0, 0
    // Predicated region
    $region14: #{tpu_custom_call.1} parent=1 // pred_check
      %p43 = pneg %p42
    $region15: #{tpu_custom_call.1} parent=1 // pred_check_branch
      %45 = sbr.rel (%p43) target = $region17
    $region16: #{tpu_custom_call.1} parent=1 // pred_region
      %vm46 = vcmask 7168
      %47 = vst.msk [vmem:[#allocation2] sm:$0xff] %vm46, 0.0
      %48 = vst.msk [vmem:[#allocation3] sm:$0xff] %vm46, 0.0
      %49 = vst.msk [vmem:[#allocation4] sm:$0xff] %vm46, 0.0
    $region17: #{tpu_custom_call.1} parent=1 // pred_fallthru
      _
    %v50 = vld [vmem:[#allocation5] sm:$0xff]
    %v51 = vld [vmem:[%s40] sm:$0x1]
    %v52 = vrot.slane %v50, 4
    %v53 = vmax.f32 %v50, %v52
    %v54 = vrot.slane %v53, 2
    %v55 = vmax.f32 %v53, %v54
    %v56 = vrot.slane %v55, 1
    %v57 = vmax.f32 %v55, %v56
    %v58 = vsub.f32 %v50, %v57
    %v59 = vmul.f32 %v58, 1.442695
    %v60 = vpow.pop %v59
    %v61 = vrot.slane %v60, 4
    %v62 = vadd.f32 %v60, %v61
    %v63 = vrot.slane %v62, 2
    %v64 = vadd.f32 %v62, %v63
    %v65 = vrot.slane %v64, 1
    %v66 = vadd.f32 %v64, %v65
    %v67 = vrcp.pop %v66
    %v68 = vmul.f32 %v60, %v67
    %vm69 = vcmp.ge.s32.totalorder %v51, 0
    %v70 = vsel %vm69, 1, 0
    %v71 = vcvt.s32.f32 %v70
    %v72 = vlaneseq
    %v73 = vshrl.u32 %v72, 7
    %v74 = vlaneseq
    %v75 = vshrl.u32 %v74, 7
    %v76 = vsub.s32 0, %v75
    %v77 = vrot.slane %v51, %v76
    %vm78 = vcmp.eq.s32.totalorder %v73, %v77
    %v79 = vsel %vm78, 1, 0
    %v80 = vcvt.s32.f32 %v79
    %v81 = vld [vmem:[#allocation2] sm:$0xff]
    %v83 = vlaneseq
    %v84 = vshrl.u32 %v83, 7
    %v85 = vsub.s32 0, %v84
    %v86 = vrot.slane %v71, %v85
    %v88 = vmul.f32 %v68, %v86
    %89 = vadd.xlane.f32.xlu0 %v88
    %v90 = vpop.xlane.xlu0 %89
    %v91 = vadd.f32 %v81, %v90
    %vm92 = vcmask 7168
    %93 = vst.msk [vmem:[#allocation2] sm:$0xff] %vm92, %v91
    %v94 = vld [vmem:[#allocation3] sm:$0xff]
    %95 = vadd.xlane.f32.xlu0 %v80
    %v96 = vpop.xlane.xlu0 %95
    %v97 = vadd.f32 %v94, %v96
    %98 = vst.msk [vmem:[#allocation3] sm:$0xff] %vm92, %v97
    %v99 = vld [vmem:[#allocation4] sm:$0xff]
    %v100 = vmul.f32 %v68, %v80
    %101 = vadd.xlane.f32.xlu0 %v100
    %v102 = vpop.xlane.xlu0 %101
    %v103 = vadd.f32 %v99, %v102
    %104 = vst.msk [vmem:[#allocation4] sm:$0xff] %vm92, %v103
    // Predicated region
    $region18: #{tpu_custom_call.1} parent=1 // pred_check
      %p105 = pneg %p42
    $region19: #{tpu_custom_call.1} parent=1 // pred_check_branch
      %107 = sbr.rel (%p105) target = $region21
    $region20: #{tpu_custom_call.1} parent=1 // pred_region
      %v108 = vlaneseq
      %v109 = vand.u32 %v108, 127
      %vm110 = vcmp.eq.s32.totalorder %v109, 0
      %v111 = vld [vmem:[#allocation2] sm:$0xff]
      %113 = vset.pattern.permute.xlu0 0
      %114 = vperm.xlu0 %113, %v111
      %v115 = vpop.permute.xlu0 %114
      %v117 = vsel %vm110, %v115, 0.0
      %vm118 = vcmp.eq.s32.totalorder %v109, 1
      %v119 = vld [vmem:[#allocation3] sm:$0xff]
      %121 = vset.pattern.permute.xlu0 0
      %122 = vperm.xlu0 %121, %v119
      %v123 = vpop.permute.xlu0 %122
      %v125 = vsel %vm118, %v123, 0.0
      %v126 = vadd.f32 %v117, %v125
      %vm127 = vcmp.eq.s32.totalorder %v109, 2
      %v128 = vld [vmem:[#allocation4] sm:$0xff]
      %130 = vset.pattern.permute.xlu0 0
      %131 = vperm.xlu0 %130, %v128
      %v132 = vpop.permute.xlu0 %131
      %v134 = vsel %vm127, %v132, 0.0
      %v135 = vadd.f32 %v126, %v134
      %136 = vst [vmem:[#allocation8] sm:$0xff] %v135
    $region21: #{tpu_custom_call.1} parent=1 // pred_fallthru
      _
    // Predicated region
    $region22: #{tpu_custom_call.1} parent=1 // pred_check
      _
    $region23: #{tpu_custom_call.1} parent=1 // pred_check_branch
      %138 = sbr.rel (0) target = $region25
    $region24: #{tpu_custom_call.1} parent=1 // pred_region
      %s140 = ssub.s32 128, 128
      %141 = vsyncadd [#allocation7], %s140
      %s143 = sshll.u32 [#allocation8], 4
      %s144 = int_to_ptr.vmem [resolvable:$true] %s143
      %146 = dma.vmem_to_hbm [thread:$0]  %s144, 128, %s2, [#allocation7]
    $region25: #{tpu_custom_call.1} parent=1 // pred_fallthru
      _
    // Predicated region
    $region26: #{tpu_custom_call.1} parent=1 // pred_check
      _
    $region27: #{tpu_custom_call.1} parent=1 // pred_check_branch
      %148 = sbr.rel (0) target = $region29
    $region28: #{tpu_custom_call.1} parent=1 // pred_region
      %149 = dma.done [#allocation7], 128
    $region29: #{tpu_custom_call.1} parent=1 // pred_fallthru
      _
    %150 = vsyncpa [#allocation6], 1
    %151 = vsyncpa [#allocation7], 1

</llo_original>
